<compile_context>
chip_gen: v6e
topology: v6e:2x2x1
jax: 0.10.0
libtpu: 0.0.40
codegen_flags: <defaults>
</compile_context>

<pallas_src>
import random

import jax
import jax.numpy as jnp
from jax import lax
from jax.experimental import pallas as pl
from jax.experimental.pallas import tpu as pltpu

# ---- "cfg" for the module (deterministic, set in-script) ----------------------
CUTOUT_RECT_REGIONS = 2   # SpecCutoutRegions: rectangles per batch item
CUTOUT_RECT_FREQ    = 5   # rectangle height (freq axis)
CUTOUT_RECT_TIME    = 3   # rectangle width  (time axis)
CUTOUT_X_REGIONS    = 2   # SpecAugment: freq stripes per batch item
CUTOUT_X_WIDTH      = 4
CUTOUT_Y_REGIONS    = 2   # SpecAugment: time stripes per batch item
CUTOUT_Y_WIDTH      = 16


def _specaug_kernel(rect_f_ref, rect_t_ref, cut_x_ref, cut_y_ref,  # (bt, R) int32 VMEM
                    x_ref, o_ref):                                  # (bt, F, T) VMEM
    """One grid step processes a (bt, F, T) slab, fully batch-vectorized."""
    bt, F, T = x_ref.shape

    f_idx = lax.broadcasted_iota(jnp.int32, (1, F, 1), 1)   # (1, F, 1)
    t_idx = lax.broadcasted_iota(jnp.int32, (1, 1, T), 2)   # (1, 1, T)

    def starts_col(vals, r):            # (bt, R) int32 -> (bt, 1, 1)
        return vals[:, r:r + 1][:, :, None]

    # SpecAugment freq stripes ("x" regions): separable (bt, F, 1) mask.
    cut_x = cut_x_ref[...]
    f_stripe = jnp.zeros((bt, F, 1), dtype=jnp.bool_)
    for r in range(CUTOUT_X_REGIONS):
        fs = starts_col(cut_x, r)
        f_stripe = f_stripe | ((f_idx >= fs) & (f_idx < fs + CUTOUT_X_WIDTH))

    # SpecAugment time stripes ("y" regions): separable (bt, 1, T) mask.
    cut_y = cut_y_ref[...]
    t_stripe = jnp.zeros((bt, 1, T), dtype=jnp.bool_)
    for r in range(CUTOUT_Y_REGIONS):
        ts = starts_col(cut_y, r)
        t_stripe = t_stripe | ((t_idx >= ts) & (t_idx < ts + CUTOUT_Y_WIDTH))

    mask = f_stripe | t_stripe          # single broadcast to (bt, F, T)

    # SpecCutoutRegions rectangles: 1-D compares + one (bt,F,T)-wide AND/OR each.
    rect_f = rect_f_ref[...]
    rect_t = rect_t_ref[...]
    for r in range(CUTOUT_RECT_REGIONS):
        fs = starts_col(rect_f, r)
        ts = starts_col(rect_t, r)
        fm = (f_idx >= fs) & (f_idx < fs + CUTOUT_RECT_FREQ)    # (bt, F, 1)
        tm = (t_idx >= ts) & (t_idx < ts + CUTOUT_RECT_TIME)    # (bt, 1, T)
        mask = mask | (fm & tm)

    xv = x_ref[...]
    o_ref[...] = jnp.where(mask, jnp.array(0, xv.dtype), xv)   # scalar fill, one dense store


def _round_up(n, m):
    return ((n + m - 1) // m) * m


def _vmem_capacity_bytes():
    try:
        return int(pltpu.get_tpu_info().vmem_capacity_bytes)
    except Exception:
        return 64 << 20     # conservative fallback: v7x per-TC physical VMEM


def _target_block_bytes(vmem_cap):
    # Double-buffered in + out blocks -> ~4x block resident.  Target ~12 MiB
    # blocks (48 MiB scoped) on 128 MiB parts (v5e/v6e) and ~8 MiB (32 MiB) on
    # v7x's 64 MiB, amortizing the ~0.35 us per-grid-step overhead to <3%.
    return int(min(12 << 20, vmem_cap // 8))


def _pick_batch_tile(B, per_item_bytes, max_block_bytes, min_grid_steps=4):
    """Largest batch tile whose block fits the target, preferring >= min_grid_steps
    grid steps so v7x's two TensorCores each get >= 2 pipelined steps."""
    bt = max(1, min(B, max_block_bytes // max(per_item_bytes, 1)))
    if B >= min_grid_steps:
        bt = min(bt, pl.cdiv(B, min_grid_steps))
    return int(bt)


def spectrogram_augmentation(x, rect_f, rect_t, cut_x, cut_y):
    """x: (B, F, T) float spectrogram.
    rect_f / rect_t: (B, CUTOUT_RECT_REGIONS) int32 rectangle starts (freq / time).
    cut_x: (B, CUTOUT_X_REGIONS) int32 freq-stripe starts.
    cut_y: (B, CUTOUT_Y_REGIONS) int32 time-stripe starts."""
    B, F, T = x.shape
    itemsize = jnp.dtype(x.dtype).itemsize

    # Lane-dense stores: pad T to a multiple of 128 and F to a multiple of 8,
    # pad B up to a whole number of batch tiles; slice the output back afterwards.
    F_pad = _round_up(F, 8)
    T_pad = _round_up(T, 128)
    per_item_bytes = F_pad * T_pad * itemsize

    vmem_cap = _vmem_capacity_bytes()
    bt = _pick_batch_tile(B, per_item_bytes, _target_block_bytes(vmem_cap))
    G = pl.cdiv(B, bt)
    B_pad = G * bt

    if (B_pad, F_pad, T_pad) != (B, F, T):
        x_p = jnp.pad(x, ((0, B_pad - B), (0, F_pad - F), (0, T_pad - T)))
    else:
        x_p = x

    def prep_starts(s):                  # (B, R) -> (G, bt, R) int32
        s = jnp.asarray(s, dtype=jnp.int32)
        if B_pad != B:
            s = jnp.pad(s, ((0, B_pad - B), (0, 0)))
        return s.reshape(G, bt, s.shape[1])

    rect_f3, rect_t3, cut_x3, cut_y3 = map(prep_starts, (rect_f, rect_t, cut_x, cut_y))

    block_bytes = bt * per_item_bytes
    # Explicit scoped-VMEM budget covering double-buffered in+out blocks + slack.
    vmem_limit = int(min(vmem_cap - (8 << 20),
                         max(16 << 20, 4 * block_bytes + (4 << 20))))

    def starts_spec(arr):
        return pl.BlockSpec((None, bt, arr.shape[-1]), lambda b: (b, 0, 0))

    slab_spec = pl.BlockSpec((bt, F_pad, T_pad), lambda b: (b, 0, 0))

    out = pl.pallas_call(
        _specaug_kernel,
        out_shape=jax.ShapeDtypeStruct((B_pad, F_pad, T_pad), x.dtype),
        grid=(G,),
        in_specs=[starts_spec(rect_f3), starts_spec(rect_t3),
                  starts_spec(cut_x3), starts_spec(cut_y3),
                  slab_spec],
        out_specs=slab_spec,
        compiler_params=pltpu.CompilerParams(
            dimension_semantics=("parallel",),
            vmem_limit_bytes=vmem_limit),
        # Pure bandwidth op: hint the XLA scheduler so the custom call overlaps
        # with surrounding compute.
        cost_estimate=pl.CostEstimate(
            flops=B_pad * F_pad * T_pad,
            transcendentals=0,
            bytes_accessed=2 * B_pad * F_pad * T_pad * itemsize),
    )(rect_f3, rect_t3, cut_x3, cut_y3, x_p)

    if (B_pad, F_pad, T_pad) != (B, F, T):
        out = out[:B, :F, :T]
    return out


# TODO(synk): the module's host-side random.Random draws cannot be reproduced
# on-device; start indices are drawn on the host (same semantics, different RNG
# stream) and passed in as int32 inputs.
def _host_random_starts(B, F, T, seed=0):
    """Replicates the host-side random.Random draw order of the PyTorch module.
    Returns (B, R)-shaped int32 arrays of start indices."""
    rng = random.Random(seed)
    rect_f = [[0] * CUTOUT_RECT_REGIONS for _ in range(B)]
    rect_t = [[0] * CUTOUT_RECT_REGIONS for _ in range(B)]
    cut_x = [[0] * CUTOUT_X_REGIONS for _ in range(B)]
    cut_y = [[0] * CUTOUT_Y_REGIONS for _ in range(B)]
    # SpecCutoutRegions draws first (same order as the PyTorch forward)
    for b in range(B):
        for r in range(CUTOUT_RECT_REGIONS):
            rect_f[b][r] = int(rng.uniform(0, F - CUTOUT_RECT_FREQ))
            rect_t[b][r] = int(rng.uniform(0, T - CUTOUT_RECT_TIME))
    # then SpecAugment
    for b in range(B):
        for r in range(CUTOUT_X_REGIONS):
            cut_x[b][r] = int(rng.uniform(0, F - CUTOUT_X_WIDTH))
        for r in range(CUTOUT_Y_REGIONS):
            cut_y[b][r] = int(rng.uniform(0, T - CUTOUT_Y_WIDTH))
    to_arr = lambda a: jnp.asarray(a, dtype=jnp.int32)
    return to_arr(rect_f), to_arr(rect_t), to_arr(cut_x), to_arr(cut_y)


def _reference(x, rect_f, rect_t, cut_x, cut_y):
    """Pure-JAX reference of the masked_fill semantics."""
    B, F, T = x.shape
    f_idx = jnp.arange(F)[:, None]
    t_idx = jnp.arange(T)[None, :]
    out = []
    for b in range(B):
        mask = jnp.zeros((F, T), dtype=jnp.bool_)
        for r in range(CUTOUT_RECT_REGIONS):
            fs = int(rect_f[b, r]); ts = int(rect_t[b, r])
            mask = mask | ((f_idx >= fs) & (f_idx < fs + CUTOUT_RECT_FREQ) &
                           (t_idx >= ts) & (t_idx < ts + CUTOUT_RECT_TIME))
        for r in range(CUTOUT_X_REGIONS):
            fs = int(cut_x[b, r])
            mask = mask | ((f_idx >= fs) & (f_idx < fs + CUTOUT_X_WIDTH))
        for r in range(CUTOUT_Y_REGIONS):
            ts = int(cut_y[b, r])
            mask = mask | ((t_idx >= ts) & (t_idx < ts + CUTOUT_Y_WIDTH))
        out.append(jnp.where(mask, 0.0, x[b]))
    return jnp.stack(out)


if __name__ == "__main__":
    # Deliberately non-aligned shapes (B not a tile multiple, T not a multiple of
    # 128) to exercise the wrapper's pad / cdiv-grid / slice-back path.
    B, F, T = 7, 16, 100
    key = jax.random.PRNGKey(0)
    x = jax.random.normal(key, (B, F, T), dtype=jnp.float32)

    rect_f, rect_t, cut_x, cut_y = _host_random_starts(B, F, T, seed=0)

    out = spectrogram_augmentation(x, rect_f, rect_t, cut_x, cut_y)
    out = jax.block_until_ready(out)

    ref = _reference(x, rect_f, rect_t, cut_x, cut_y)
    assert out.shape == x.shape and out.dtype == x.dtype
    assert jnp.allclose(out, ref), "Pallas output mismatch vs reference"
    print("KERNEL_OK")
</pallas_src>

<mosaic_0001>
module attributes {stable_mosaic.version = 11 : i64} {
  func.func @_specaug_kernel(%arg0: i32, %arg1: memref<1x2x2xi32, #tpu.memory_space<vmem>>, %arg2: memref<1x2x2xi32, #tpu.memory_space<vmem>>, %arg3: memref<1x2x2xi32, #tpu.memory_space<vmem>>, %arg4: memref<1x2x2xi32, #tpu.memory_space<vmem>>, %arg5: memref<2x16x128xf32, #tpu.memory_space<vmem>>, %arg6: memref<2x16x128xf32, #tpu.memory_space<vmem>>) attributes {dimension_semantics = [#tpu.dimension_semantics<parallel>], iteration_bounds = array<i64: 4>, scalar_prefetch = 0 : i64, scratch_operands = 0 : i64, tpu.core_type = #tpu.core_type<tc>, window_params = [{transform_indices = @transform_0, window_bounds = array<i64: 1, 2, 2>}, {transform_indices = @transform_1, window_bounds = array<i64: 1, 2, 2>}, {transform_indices = @transform_2, window_bounds = array<i64: 1, 2, 2>}, {transform_indices = @transform_3, window_bounds = array<i64: 1, 2, 2>}, {transform_indices = @transform_4, window_bounds = array<i64: 2, 16, 128>}, {transform_indices = @transform_5, window_bounds = array<i64: 2, 16, 128>}]} {
    %0 = tpu.iota {dimensions = array<i32: 1>} : vector<1x16x1xi32>
    %1 = tpu.iota {dimensions = array<i32: 2>} : vector<1x1x128xi32>
    %c0 = arith.constant 0 : index
    %c0_0 = arith.constant 0 : index
    %c0_1 = arith.constant 0 : index
    %2 = vector.load %arg3[%c0, %c0_0, %c0_1] : memref<1x2x2xi32, #tpu.memory_space<vmem>>, vector<1x2x2xi32>
    %3 = vector.shape_cast %2 : vector<1x2x2xi32> to vector<2x2xi32>
    %false = arith.constant false
    %4 = vector.broadcast %false : i1 to vector<2x16x1xi1>
    %5 = vector.extract_strided_slice %3 {offsets = [0, 0], sizes = [2, 1], strides = [1, 1]} : vector<2x2xi32> to vector<2x1xi32>
    %6 = vector.shape_cast %5 : vector<2x1xi32> to vector<2x1x1xi32>
    %7 = vector.broadcast %0 : vector<1x16x1xi32> to vector<2x16x1xi32>
    %8 = vector.broadcast %6 : vector<2x1x1xi32> to vector<2x16x1xi32>
    %9 = arith.cmpi sge, %7, %8 : vector<2x16x1xi32>
    %c4_i32 = arith.constant 4 : i32
    %10 = vector.broadcast %c4_i32 : i32 to vector<2x1x1xi32>
    %11 = arith.addi %6, %10 : vector<2x1x1xi32>
    %12 = vector.broadcast %0 : vector<1x16x1xi32> to vector<2x16x1xi32>
    %13 = vector.broadcast %11 : vector<2x1x1xi32> to vector<2x16x1xi32>
    %14 = arith.cmpi slt, %12, %13 : vector<2x16x1xi32>
    %15 = arith.andi %9, %14 : vector<2x16x1xi1>
    %16 = arith.ori %4, %15 : vector<2x16x1xi1>
    %17 = vector.extract_strided_slice %3 {offsets = [0, 1], sizes = [2, 1], strides = [1, 1]} : vector<2x2xi32> to vector<2x1xi32>
    %18 = vector.shape_cast %17 : vector<2x1xi32> to vector<2x1x1xi32>
    %19 = vector.broadcast %0 : vector<1x16x1xi32> to vector<2x16x1xi32>
    %20 = vector.broadcast %18 : vector<2x1x1xi32> to vector<2x16x1xi32>
    %21 = arith.cmpi sge, %19, %20 : vector<2x16x1xi32>
    %c4_i32_2 = arith.constant 4 : i32
    %22 = vector.broadcast %c4_i32_2 : i32 to vector<2x1x1xi32>
    %23 = arith.addi %18, %22 : vector<2x1x1xi32>
    %24 = vector.broadcast %0 : vector<1x16x1xi32> to vector<2x16x1xi32>
    %25 = vector.broadcast %23 : vector<2x1x1xi32> to vector<2x16x1xi32>
    %26 = arith.cmpi slt, %24, %25 : vector<2x16x1xi32>
    %27 = arith.andi %21, %26 : vector<2x16x1xi1>
    %28 = arith.ori %16, %27 : vector<2x16x1xi1>
    %c0_3 = arith.constant 0 : index
    %c0_4 = arith.constant 0 : index
    %c0_5 = arith.constant 0 : index
    %29 = vector.load %arg4[%c0_3, %c0_4, %c0_5] : memref<1x2x2xi32, #tpu.memory_space<vmem>>, vector<1x2x2xi32>
    %30 = vector.shape_cast %29 : vector<1x2x2xi32> to vector<2x2xi32>
    %false_6 = arith.constant false
    %31 = vector.broadcast %false_6 : i1 to vector<2x1x128xi1>
    %32 = vector.extract_strided_slice %30 {offsets = [0, 0], sizes = [2, 1], strides = [1, 1]} : vector<2x2xi32> to vector<2x1xi32>
    %33 = vector.shape_cast %32 : vector<2x1xi32> to vector<2x1x1xi32>
    %34 = vector.broadcast %1 : vector<1x1x128xi32> to vector<2x1x128xi32>
    %35 = vector.broadcast %33 : vector<2x1x1xi32> to vector<2x1x128xi32>
    %36 = arith.cmpi sge, %34, %35 : vector<2x1x128xi32>
    %c16_i32 = arith.constant 16 : i32
    %37 = vector.broadcast %c16_i32 : i32 to vector<2x1x1xi32>
    %38 = arith.addi %33, %37 : vector<2x1x1xi32>
    %39 = vector.broadcast %1 : vector<1x1x128xi32> to vector<2x1x128xi32>
    %40 = vector.broadcast %38 : vector<2x1x1xi32> to vector<2x1x128xi32>
    %41 = arith.cmpi slt, %39, %40 : vector<2x1x128xi32>
    %42 = arith.andi %36, %41 : vector<2x1x128xi1>
    %43 = arith.ori %31, %42 : vector<2x1x128xi1>
    %44 = vector.extract_strided_slice %30 {offsets = [0, 1], sizes = [2, 1], strides = [1, 1]} : vector<2x2xi32> to vector<2x1xi32>
    %45 = vector.shape_cast %44 : vector<2x1xi32> to vector<2x1x1xi32>
    %46 = vector.broadcast %1 : vector<1x1x128xi32> to vector<2x1x128xi32>
    %47 = vector.broadcast %45 : vector<2x1x1xi32> to vector<2x1x128xi32>
    %48 = arith.cmpi sge, %46, %47 : vector<2x1x128xi32>
    %c16_i32_7 = arith.constant 16 : i32
    %49 = vector.broadcast %c16_i32_7 : i32 to vector<2x1x1xi32>
    %50 = arith.addi %45, %49 : vector<2x1x1xi32>
    %51 = vector.broadcast %1 : vector<1x1x128xi32> to vector<2x1x128xi32>
    %52 = vector.broadcast %50 : vector<2x1x1xi32> to vector<2x1x128xi32>
    %53 = arith.cmpi slt, %51, %52 : vector<2x1x128xi32>
    %54 = arith.andi %48, %53 : vector<2x1x128xi1>
    %55 = arith.ori %43, %54 : vector<2x1x128xi1>
    %56 = vector.broadcast %28 : vector<2x16x1xi1> to vector<2x16x128xi1>
    %57 = vector.broadcast %55 : vector<2x1x128xi1> to vector<2x16x128xi1>
    %58 = arith.ori %56, %57 : vector<2x16x128xi1>
    %c0_8 = arith.constant 0 : index
    %c0_9 = arith.constant 0 : index
    %c0_10 = arith.constant 0 : index
    %59 = vector.load %arg1[%c0_8, %c0_9, %c0_10] : memref<1x2x2xi32, #tpu.memory_space<vmem>>, vector<1x2x2xi32>
    %60 = vector.shape_cast %59 : vector<1x2x2xi32> to vector<2x2xi32>
    %c0_11 = arith.constant 0 : index
    %c0_12 = arith.constant 0 : index
    %c0_13 = arith.constant 0 : index
    %61 = vector.load %arg2[%c0_11, %c0_12, %c0_13] : memref<1x2x2xi32, #tpu.memory_space<vmem>>, vector<1x2x2xi32>
    %62 = vector.shape_cast %61 : vector<1x2x2xi32> to vector<2x2xi32>
    %63 = vector.extract_strided_slice %60 {offsets = [0, 0], sizes = [2, 1], strides = [1, 1]} : vector<2x2xi32> to vector<2x1xi32>
    %64 = vector.shape_cast %63 : vector<2x1xi32> to vector<2x1x1xi32>
    %65 = vector.extract_strided_slice %62 {offsets = [0, 0], sizes = [2, 1], strides = [1, 1]} : vector<2x2xi32> to vector<2x1xi32>
    %66 = vector.shape_cast %65 : vector<2x1xi32> to vector<2x1x1xi32>
    %67 = vector.broadcast %0 : vector<1x16x1xi32> to vector<2x16x1xi32>
    %68 = vector.broadcast %64 : vector<2x1x1xi32> to vector<2x16x1xi32>
    %69 = arith.cmpi sge, %67, %68 : vector<2x16x1xi32>
    %c5_i32 = arith.constant 5 : i32
    %70 = vector.broadcast %c5_i32 : i32 to vector<2x1x1xi32>
    %71 = arith.addi %64, %70 : vector<2x1x1xi32>
    %72 = vector.broadcast %0 : vector<1x16x1xi32> to vector<2x16x1xi32>
    %73 = vector.broadcast %71 : vector<2x1x1xi32> to vector<2x16x1xi32>
    %74 = arith.cmpi slt, %72, %73 : vector<2x16x1xi32>
    %75 = arith.andi %69, %74 : vector<2x16x1xi1>
    %76 = vector.broadcast %1 : vector<1x1x128xi32> to vector<2x1x128xi32>
    %77 = vector.broadcast %66 : vector<2x1x1xi32> to vector<2x1x128xi32>
    %78 = arith.cmpi sge, %76, %77 : vector<2x1x128xi32>
    %c3_i32 = arith.constant 3 : i32
    %79 = vector.broadcast %c3_i32 : i32 to vector<2x1x1xi32>
    %80 = arith.addi %66, %79 : vector<2x1x1xi32>
    %81 = vector.broadcast %1 : vector<1x1x128xi32> to vector<2x1x128xi32>
    %82 = vector.broadcast %80 : vector<2x1x1xi32> to vector<2x1x128xi32>
    %83 = arith.cmpi slt, %81, %82 : vector<2x1x128xi32>
    %84 = arith.andi %78, %83 : vector<2x1x128xi1>
    %85 = vector.broadcast %75 : vector<2x16x1xi1> to vector<2x16x128xi1>
    %86 = vector.broadcast %84 : vector<2x1x128xi1> to vector<2x16x128xi1>
    %87 = arith.andi %85, %86 : vector<2x16x128xi1>
    %88 = arith.ori %58, %87 : vector<2x16x128xi1>
    %89 = vector.extract_strided_slice %60 {offsets = [0, 1], sizes = [2, 1], strides = [1, 1]} : vector<2x2xi32> to vector<2x1xi32>
    %90 = vector.shape_cast %89 : vector<2x1xi32> to vector<2x1x1xi32>
    %91 = vector.extract_strided_slice %62 {offsets = [0, 1], sizes = [2, 1], strides = [1, 1]} : vector<2x2xi32> to vector<2x1xi32>
    %92 = vector.shape_cast %91 : vector<2x1xi32> to vector<2x1x1xi32>
    %93 = vector.broadcast %0 : vector<1x16x1xi32> to vector<2x16x1xi32>
    %94 = vector.broadcast %90 : vector<2x1x1xi32> to vector<2x16x1xi32>
    %95 = arith.cmpi sge, %93, %94 : vector<2x16x1xi32>
    %c5_i32_14 = arith.constant 5 : i32
    %96 = vector.broadcast %c5_i32_14 : i32 to vector<2x1x1xi32>
    %97 = arith.addi %90, %96 : vector<2x1x1xi32>
    %98 = vector.broadcast %0 : vector<1x16x1xi32> to vector<2x16x1xi32>
    %99 = vector.broadcast %97 : vector<2x1x1xi32> to vector<2x16x1xi32>
    %100 = arith.cmpi slt, %98, %99 : vector<2x16x1xi32>
    %101 = arith.andi %95, %100 : vector<2x16x1xi1>
    %102 = vector.broadcast %1 : vector<1x1x128xi32> to vector<2x1x128xi32>
    %103 = vector.broadcast %92 : vector<2x1x1xi32> to vector<2x1x128xi32>
    %104 = arith.cmpi sge, %102, %103 : vector<2x1x128xi32>
    %c3_i32_15 = arith.constant 3 : i32
    %105 = vector.broadcast %c3_i32_15 : i32 to vector<2x1x1xi32>
    %106 = arith.addi %92, %105 : vector<2x1x1xi32>
    %107 = vector.broadcast %1 : vector<1x1x128xi32> to vector<2x1x128xi32>
    %108 = vector.broadcast %106 : vector<2x1x1xi32> to vector<2x1x128xi32>
    %109 = arith.cmpi slt, %107, %108 : vector<2x1x128xi32>
    %110 = arith.andi %104, %109 : vector<2x1x128xi1>
    %111 = vector.broadcast %101 : vector<2x16x1xi1> to vector<2x16x128xi1>
    %112 = vector.broadcast %110 : vector<2x1x128xi1> to vector<2x16x128xi1>
    %113 = arith.andi %111, %112 : vector<2x16x128xi1>
    %114 = arith.ori %88, %113 : vector<2x16x128xi1>
    %c0_16 = arith.constant 0 : index
    %c0_17 = arith.constant 0 : index
    %c0_18 = arith.constant 0 : index
    %115 = vector.load %arg5[%c0_16, %c0_17, %c0_18] : memref<2x16x128xf32, #tpu.memory_space<vmem>>, vector<2x16x128xf32>
    %cst = arith.constant 0.000000e+00 : f32
    %116 = vector.broadcast %cst : f32 to vector<2x16x128xf32>
    %117 = arith.select %114, %116, %115 : vector<2x16x128xi1>, vector<2x16x128xf32>
    %c0_19 = arith.constant 0 : index
    %c0_20 = arith.constant 0 : index
    %c0_21 = arith.constant 0 : index
    %118 = vector.load %arg6[%c0_19, %c0_20, %c0_21] : memref<2x16x128xf32, #tpu.memory_space<vmem>>, vector<2x16x128xf32>
    tpu.vector_store %arg6[%c0_19, %c0_20, %c0_21], %117 {strides = array<i32>} : memref<2x16x128xf32, #tpu.memory_space<vmem>>, vector<2x16x128xf32>,
    return
  }
  func.func @transform_0(%arg0: i32) -> (i32, i32, i32) {
    %c0_i32 = arith.constant 0 : i32
    %c0_i32_0 = arith.constant 0 : i32
    %c0_i32_1 = arith.constant 0 : i32
    return %arg0, %c0_i32, %c0_i32_0 : i32, i32, i32
  }
  func.func @transform_1(%arg0: i32) -> (i32, i32, i32) {
    %c0_i32 = arith.constant 0 : i32
    %c0_i32_0 = arith.constant 0 : i32
    %c0_i32_1 = arith.constant 0 : i32
    return %arg0, %c0_i32, %c0_i32_0 : i32, i32, i32
  }
  func.func @transform_2(%arg0: i32) -> (i32, i32, i32) {
    %c0_i32 = arith.constant 0 : i32
    %c0_i32_0 = arith.constant 0 : i32
    %c0_i32_1 = arith.constant 0 : i32
    return %arg0, %c0_i32, %c0_i32_0 : i32, i32, i32
  }
  func.func @transform_3(%arg0: i32) -> (i32, i32, i32) {
    %c0_i32 = arith.constant 0 : i32
    %c0_i32_0 = arith.constant 0 : i32
    %c0_i32_1 = arith.constant 0 : i32
    return %arg0, %c0_i32, %c0_i32_0 : i32, i32, i32
  }
  func.func @transform_4(%arg0: i32) -> (i32, i32, i32) {
    %c0_i32 = arith.constant 0 : i32
    %c0_i32_0 = arith.constant 0 : i32
    %c0_i32_1 = arith.constant 0 : i32
    return %arg0, %c0_i32, %c0_i32_0 : i32, i32, i32
  }
  func.func @transform_5(%arg0: i32) -> (i32, i32, i32) {
    %c0_i32 = arith.constant 0 : i32
    %c0_i32_0 = arith.constant 0 : i32
    %c0_i32_1 = arith.constant 0 : i32
    return %arg0, %c0_i32, %c0_i32_0 : i32, i32, i32
  }
}

</mosaic_0001>

<llo_original>
// kernel: tpu_custom_call.1
$region0: #{tpu_custom_call.1}
  #allocation0 [shape = 'u32[]', space=smem, size = 0x4, offset = 0x4, fixed_abs, tag = 'smem constant byte address 0x4 - core index']
  #allocation1 [shape = 'u32[144,128]{1,0:T(1,128)}', space=vmem, size = 0x12000, scoped, tag = 'internal scratch']
  %s0 = inlined_call_operand.vmem [shape: s32[4,2,2], index: 0, kind: input, shape index: {}]
  %s1 = inlined_call_operand.vmem [shape: s32[4,2,2], index: 1, kind: input, shape index: {}]
  %s2 = inlined_call_operand.vmem [shape: s32[4,2,2], index: 2, kind: input, shape index: {}]
  %s3 = inlined_call_operand.vmem [shape: s32[4,2,2], index: 3, kind: input, shape index: {}]
  %s4 = inlined_call_operand.hbm [shape: f32[8,16,128], index: 4, kind: input, shape index: {}]
  %s5 = inlined_call_operand.hbm [shape: f32[8,16,128], index: 5, kind: output, shape index: {}]
  %s6 = sld [smem:[#allocation0]]
  $region57: #{tpu_custom_call.1} parent=0
    _
  %s8 = ssub.s32 1, %s6
  %s9 = scalar_select 0, %s8, %s6
  $region1: #{tpu_custom_call.1} parent=0
    #allocation2 [shape = 'u8[32768]{0}', space=vmem, size = 0x8000, scoped, tag = 'input window, operand 4']
    #allocation3 [shape = 's32[2]{0}', space=sflag, size = 0x8, scoped, tag = 'scoped memory for tpu_custom_call.1']
    #allocation4 [shape = 's32[2]{0}', space=sflag, size = 0x8, scoped, tag = 'scoped memory for tpu_custom_call.1']
    #allocation5 [shape = 'u8[32768]{0}', space=vmem, size = 0x8000, scoped, tag = 'output window, operand 0']
    %10 = vsyncpa [#allocation3], 0
    %s11 = scalar_lea.sflag [#allocation3], 1
    %12 = vsyncpa %s11, 0
    %13 = vsyncpa [#allocation4], 0
    %s14 = scalar_lea.sflag [#allocation4], 1
    %15 = vsyncpa %s14, 0
    loop: start=0, step=1, limit=6
    $region2: #{tpu_custom_call.1} parent=1 // loop_pre_header
      _
    $region3: #{tpu_custom_call.1} parent=1 // loop_header
      %s17 = sphi 0, %s21
      %p18 = scmp.ge.s32.totalorder %s17, 6
      %s27 = sphi 0, %s29
      %s30 = sphi 0, %s27
      %s31 = sphi 0, %s30
      %s47 = sphi 0, %s31
      %s53 = sphi 0, %s55
      %s56 = sphi 0, %s53
      %s57 = sphi 0, %s56
      %s73 = sphi 0, %s57
      %s79 = sphi 0, %s81
      %s82 = sphi 0, %s79
      %s83 = sphi 0, %s82
      %s99 = sphi 0, %s83
      %s105 = sphi 0, %s107
      %s108 = sphi 0, %s105
      %s109 = sphi 0, %s108
      %s125 = sphi 0, %s109
      %s131 = sphi 0, %s133
      %s134 = sphi 0, %s131
      %s135 = sphi 0, %s134
      %s151 = sphi 0, %s135
      %s157 = sphi 0, %s159
      %s160 = sphi 0, %s157
      %s161 = sphi 0, %s160
      %s177 = sphi 0, %s161
    $region4: #{tpu_custom_call.1} parent=1 // loop_header_branch
      %20 = sbr.rel (%p18) target = $region8
    $region5: #{tpu_custom_call.1} parent=1 // loop_body
      %s22 = ssub.s32 %s17, 1
      %s23 = ssub.s32 %s17, 2
      %s24 = sadd.s32 %s17, 1
      %s25 = ssub.s32 %s17, %s24
      %p26 = scmp.eq.s32.totalorder %s25, 0
      %s28 = sadd.s32 %s27, 1
      %s29 = scalar_select %p26, %s27, %s28
      %p32 = pneg %p26
      %p33 = scmp.eq.s32.totalorder %s17, 3
      %p34 = por %p32, %p33
      %p35 = scmp.ne.s32.totalorder %s27, %s30
      %p36 = scmp.eq.s32.totalorder %s17, 0
      %p37 = por %p35, %p36
      %p38 = scmp.ne.s32.totalorder %s27, %s30
      %p39 = scmp.eq.s32.totalorder %s22, 3
      %p40 = por %p38, %p39
      %p41 = scmp.ne.s32.totalorder %s30, %s31
      %p42 = scmp.eq.s32.totalorder %s22, 0
      %p43 = por %p41, %p42
      %p44 = scmp.ne.s32.totalorder %s30, %s31
      %p45 = scmp.eq.s32.totalorder %s23, 3
      %p46 = por %p44, %p45
      %p48 = scmp.ne.s32.totalorder %s31, %s47
      %p49 = scmp.eq.s32.totalorder %s23, 0
      %p50 = por %p48, %p49
      %s51 = ssub.s32 %s17, %s24
      %p52 = scmp.eq.s32.totalorder %s51, 0
      %s54 = sadd.s32 %s53, 1
      %s55 = scalar_select %p52, %s53, %s54
      %p58 = pneg %p52
      %p59 = scmp.eq.s32.totalorder %s17, 3
      %p60 = por %p58, %p59
      %p61 = scmp.ne.s32.totalorder %s53, %s56
      %p62 = scmp.eq.s32.totalorder %s17, 0
      %p63 = por %p61, %p62
      %p64 = scmp.ne.s32.totalorder %s53, %s56
      %p65 = scmp.eq.s32.totalorder %s22, 3
      %p66 = por %p64, %p65
      %p67 = scmp.ne.s32.totalorder %s56, %s57
      %p68 = scmp.eq.s32.totalorder %s22, 0
      %p69 = por %p67, %p68
      %p70 = scmp.ne.s32.totalorder %s56, %s57
      %p71 = scmp.eq.s32.totalorder %s23, 3
      %p72 = por %p70, %p71
      %p74 = scmp.ne.s32.totalorder %s57, %s73
      %p75 = scmp.eq.s32.totalorder %s23, 0
      %p76 = por %p74, %p75
      %s77 = ssub.s32 %s17, %s24
      %p78 = scmp.eq.s32.totalorder %s77, 0
      %s80 = sadd.s32 %s79, 1
      %s81 = scalar_select %p78, %s79, %s80
      %p84 = pneg %p78
      %p85 = scmp.eq.s32.totalorder %s17, 3
      %p86 = por %p84, %p85
      %p87 = scmp.ne.s32.totalorder %s79, %s82
      %p88 = scmp.eq.s32.totalorder %s17, 0
      %p89 = por %p87, %p88
      %p90 = scmp.ne.s32.totalorder %s79, %s82
      %p91 = scmp.eq.s32.totalorder %s22, 3
      %p92 = por %p90, %p91
      %p93 = scmp.ne.s32.totalorder %s82, %s83
      %p94 = scmp.eq.s32.totalorder %s22, 0
      %p95 = por %p93, %p94
      %p96 = scmp.ne.s32.totalorder %s82, %s83
      %p97 = scmp.eq.s32.totalorder %s23, 3
      %p98 = por %p96, %p97
      %p100 = scmp.ne.s32.totalorder %s83, %s99
      %p101 = scmp.eq.s32.totalorder %s23, 0
      %p102 = por %p100, %p101
      %s103 = ssub.s32 %s17, %s24
      %p104 = scmp.eq.s32.totalorder %s103, 0
      %s106 = sadd.s32 %s105, 1
      %s107 = scalar_select %p104, %s105, %s106
      %p110 = pneg %p104
      %p111 = scmp.eq.s32.totalorder %s17, 3
      %p112 = por %p110, %p111
      %p113 = scmp.ne.s32.totalorder %s105, %s108
      %p114 = scmp.eq.s32.totalorder %s17, 0
      %p115 = por %p113, %p114
      %p116 = scmp.ne.s32.totalorder %s105, %s108
      %p117 = scmp.eq.s32.totalorder %s22, 3
      %p118 = por %p116, %p117
      %p119 = scmp.ne.s32.totalorder %s108, %s109
      %p120 = scmp.eq.s32.totalorder %s22, 0
      %p121 = por %p119, %p120
      %p122 = scmp.ne.s32.totalorder %s108, %s109
      %p123 = scmp.eq.s32.totalorder %s23, 3
      %p124 = por %p122, %p123
      %p126 = scmp.ne.s32.totalorder %s109, %s125
      %p127 = scmp.eq.s32.totalorder %s23, 0
      %p128 = por %p126, %p127
      %s129 = ssub.s32 %s17, %s24
      %p130 = scmp.eq.s32.totalorder %s129, 0
      %s132 = sadd.s32 %s131, 1
      %s133 = scalar_select %p130, %s131, %s132
      %p136 = pneg %p130
      %p137 = scmp.eq.s32.totalorder %s17, 3
      %p138 = por %p136, %p137
      %p139 = scmp.ne.s32.totalorder %s131, %s134
      %p140 = scmp.eq.s32.totalorder %s17, 0
      %p141 = por %p139, %p140
      %p142 = scmp.ne.s32.totalorder %s131, %s134
      %p143 = scmp.eq.s32.totalorder %s22, 3
      %p144 = por %p142, %p143
      %p145 = scmp.ne.s32.totalorder %s134, %s135
      %p146 = scmp.eq.s32.totalorder %s22, 0
      %p147 = por %p145, %p146
      %p148 = scmp.ne.s32.totalorder %s134, %s135
      %p149 = scmp.eq.s32.totalorder %s23, 3
      %p150 = por %p148, %p149
      %p152 = scmp.ne.s32.totalorder %s135, %s151
      %p153 = scmp.eq.s32.totalorder %s23, 0
      %p154 = por %p152, %p153
      %s155 = ssub.s32 %s17, %s24
      %p156 = scmp.eq.s32.totalorder %s155, 0
      %s158 = sadd.s32 %s157, 1
      %s159 = scalar_select %p156, %s157, %s158
      %p162 = pneg %p156
      %p163 = scmp.eq.s32.totalorder %s17, 3
      %p164 = por %p162, %p163
      %p165 = scmp.ne.s32.totalorder %s157, %s160
      %p166 = scmp.eq.s32.totalorder %s17, 0
      %p167 = por %p165, %p166
      %p168 = scmp.ne.s32.totalorder %s157, %s160
      %p169 = scmp.eq.s32.totalorder %s22, 3
      %p170 = por %p168, %p169
      %p171 = scmp.ne.s32.totalorder %s160, %s161
      %p172 = scmp.eq.s32.totalorder %s22, 0
      %p173 = por %p171, %p172
      %p174 = scmp.ne.s32.totalorder %s160, %s161
      %p175 = scmp.eq.s32.totalorder %s23, 3
      %p176 = por %p174, %p175
      %p178 = scmp.ne.s32.totalorder %s161, %s177
      %p179 = scmp.eq.s32.totalorder %s23, 0
      %p180 = por %p178, %p179
      %p181 = scmp.le.s32.totalorder 1, %s17
      %p182 = scmp.lt.s32.totalorder %s17, 5
      %p183 = pnand %p181, %p182
      %p184 = pneg %p183
      // Predicated region
      $region9: #{tpu_custom_call.1} parent=5 // pred_check
        _
      $region10: #{tpu_custom_call.1} parent=5 // pred_check_branch
        %186 = sbr.rel (%p183) target = $region12
      $region11: #{tpu_custom_call.1} parent=5 // pred_region
        %s187 = ssub.s32 %s17, 1
      $region12: #{tpu_custom_call.1} parent=5 // pred_fallthru
        _
      %p188 = scmp.lt.s32.totalorder %s17, 4
      // Predicated region
      $region13: #{tpu_custom_call.1} parent=5 // pred_check
        %p189 = pneg %p188
      $region14: #{tpu_custom_call.1} parent=5 // pred_check_branch
        %191 = sbr.rel (%p189) target = $region16
      $region15: #{tpu_custom_call.1} parent=5 // pred_region
        // Predicated region
        $region17: #{tpu_custom_call.1} parent=15 // pred_check
          %p192 = pneg %p37
        $region18: #{tpu_custom_call.1} parent=15 // pred_check_branch
          %194 = sbr.rel (%p192) target = $region20
        $region19: #{tpu_custom_call.1} parent=15 // pred_region
          %p195 = scmp.lt.s32.totalorder %s17, 3
          %s196 = scalar_select %p195, %s17, 3
          %s197 = smul.addr %s196, 2
          %s198 = scalar_lea.vmem %s0, %s197
        $region20: #{tpu_custom_call.1} parent=15 // pred_fallthru
          _
        // Predicated region
        $region21: #{tpu_custom_call.1} parent=15 // pred_check
          %p199 = pneg %p63
        $region22: #{tpu_custom_call.1} parent=15 // pred_check_branch
          %201 = sbr.rel (%p199) target = $region24
        $region23: #{tpu_custom_call.1} parent=15 // pred_region
          %p202 = scmp.lt.s32.totalorder %s17, 3
          %s203 = scalar_select %p202, %s17, 3
          %s204 = smul.addr %s203, 2
          %s205 = scalar_lea.vmem %s1, %s204
        $region24: #{tpu_custom_call.1} parent=15 // pred_fallthru
          _
        // Predicated region
        $region25: #{tpu_custom_call.1} parent=15 // pred_check
          %p206 = pneg %p89
        $region26: #{tpu_custom_call.1} parent=15 // pred_check_branch
          %208 = sbr.rel (%p206) target = $region28
        $region27: #{tpu_custom_call.1} parent=15 // pred_region
          %p209 = scmp.lt.s32.totalorder %s17, 3
          %s210 = scalar_select %p209, %s17, 3
          %s211 = smul.addr %s210, 2
          %s212 = scalar_lea.vmem %s2, %s211
        $region28: #{tpu_custom_call.1} parent=15 // pred_fallthru
          _
        // Predicated region
        $region29: #{tpu_custom_call.1} parent=15 // pred_check
          %p213 = pneg %p115
        $region30: #{tpu_custom_call.1} parent=15 // pred_check_branch
          %215 = sbr.rel (%p213) target = $region32
        $region31: #{tpu_custom_call.1} parent=15 // pred_region
          %p216 = scmp.lt.s32.totalorder %s17, 3
          %s217 = scalar_select %p216, %s17, 3
          %s218 = smul.addr %s217, 2
          %s219 = scalar_lea.vmem %s3, %s218
        $region32: #{tpu_custom_call.1} parent=15 // pred_fallthru
          _
        // Predicated region
        $region33: #{tpu_custom_call.1} parent=15 // pred_check
          %p220 = pneg %p141
        $region34: #{tpu_custom_call.1} parent=15 // pred_check_branch
          %222 = sbr.rel (%p220) target = $region36
        $region35: #{tpu_custom_call.1} parent=15 // pred_region
          %s223 = sand.u32 %s131, 1
          %s224 = scalar_lea.sflag [#allocation3], %s223
          %s225 = sand.u32 %s131, 1
          %s226 = smul.addr %s225, 32
          %s227 = scalar_lea.vmem [#allocation2], %s226
          %s228 = smul.u32 2, %s17
          %s230 = ssub.s32 512, 512
          %231 = vsyncadd %s224, %s230
          %s232 = smul.addr %s228, 2
          %s233 = smul.addr %s232, 128
          %s234 = scalar_lea.hbm %s4, %s233
          %s235 = sshll.u32 %s227, 4
          %s236 = int_to_ptr.vmem [resolvable:$true] %s235
          %241 = dma.hbm_to_vmem [thread:$0]  %s234, 512, %s236, %s224, 128, 128, 8
        $region36: #{tpu_custom_call.1} parent=15 // pred_fallthru
          _
      $region16: #{tpu_custom_call.1} parent=5 // pred_fallthru
        _
      %p242 = scmp.le.s32.totalorder 1, %s17
      %p243 = scmp.lt.s32.totalorder %s17, 5
      %p244 = pnand %p242, %p243
      %p245 = pneg %p244
      // Predicated region
      $region37: #{tpu_custom_call.1} parent=5 // pred_check
        _
      $region38: #{tpu_custom_call.1} parent=5 // pred_check_branch
        %247 = sbr.rel (%p244) target = $region40
      $region39: #{tpu_custom_call.1} parent=5 // pred_region
        %s248 = ssub.s32 %s17, 1
        %s249 = sand.u32 %s134, 1
        %s250 = scalar_lea.sflag [#allocation3], %s249
        %s251 = sand.u32 %s134, 1
        %s252 = smul.addr %s251, 32
        %s253 = scalar_lea.vmem [#allocation2], %s252
        // Predicated region
        $region41: #{tpu_custom_call.1} parent=39 // pred_check
          %p254 = pneg %p147
        $region42: #{tpu_custom_call.1} parent=39 // pred_check_branch
          %256 = sbr.rel (%p254) target = $region44
        $region43: #{tpu_custom_call.1} parent=39 // pred_region
          %257 = dma.done %s250, 512
        $region44: #{tpu_custom_call.1} parent=39 // pred_fallthru
          _
        %p258 = scmp.lt.s32.totalorder %s22, 3
        %s259 = scalar_select %p258, %s22, 3
        %s260 = smul.addr %s259, 2
        %s261 = scalar_lea.vmem %s0, %s260
        %p262 = pneg %p43
        %p263 = pneg %p40
        %p264 = scmp.lt.s32.totalorder %s22, 3
        %s265 = scalar_select %p264, %s22, 3
        %s266 = smul.addr %s265, 2
        %s267 = scalar_lea.vmem %s1, %s266
        %p268 = pneg %p69
        %p269 = pneg %p66
        %p270 = scmp.lt.s32.totalorder %s22, 3
        %s271 = scalar_select %p270, %s22, 3
        %s272 = smul.addr %s271, 2
        %s273 = scalar_lea.vmem %s2, %s272
        %p274 = pneg %p95
        %p275 = pneg %p92
        %p276 = scmp.lt.s32.totalorder %s22, 3
        %s277 = scalar_select %p276, %s22, 3
        %s278 = smul.addr %s277, 2
        %s279 = scalar_lea.vmem %s3, %s278
        %p280 = pneg %p121
        %p281 = pneg %p118
        %s282 = sand.u32 %s134, 1
        %s283 = scalar_lea.sflag [#allocation3], %s282
        %s284 = sand.u32 %s134, 1
        %s285 = smul.addr %s284, 32
        %s286 = scalar_lea.vmem [#allocation2], %s285
        %p287 = pneg %p147
        %p288 = pneg %p144
        %p289 = pneg %p173
        %p290 = pneg %p170
        %s291 = sand.u32 %s160, 1
        %s292 = scalar_lea.sflag [#allocation4], %s291
        %s293 = sand.u32 %s160, 1
        %s294 = smul.addr %s293, 32
        %s295 = scalar_lea.vmem [#allocation5], %s294
        %p296 = scmp.lt.s32.totalorder %s22, 3
        %s297 = scalar_select %p296, %s22, 3
        %s298 = smul.addr %s297, 2
        %s299 = scalar_lea.vmem %s0, %s298
        %p300 = scmp.lt.s32.totalorder %s22, 3
        %s301 = scalar_select %p300, %s22, 3
        %s302 = smul.addr %s301, 2
        %s303 = scalar_lea.vmem %s1, %s302
        %p304 = scmp.lt.s32.totalorder %s22, 3
        %s305 = scalar_select %p304, %s22, 3
        %s306 = smul.addr %s305, 2
        %s307 = scalar_lea.vmem %s2, %s306
        %p308 = scmp.lt.s32.totalorder %s22, 3
        %s309 = scalar_select %p308, %s22, 3
        %s310 = smul.addr %s309, 2
        %s311 = scalar_lea.vmem %s3, %s310
        %s312 = smul.u32 2, %s22
        %s313 = smul.u32 2, %s22
        %v314 = vlaneseq
        %v315 = vshrl.u32 %v314, 7
        %v316 = vadd.s32 %v315, 8
        %v317 = vlaneseq
        %v318 = vand.u32 %v317, 127
        %v319 = vld [vmem:[%s307] sm:$0x3]
        %v321 = vunpack.c.l.s4 1966171168
        %v322 = vunpack.c.0.s8 %v321
        %v323 = vlaneseq
        %v324 = vshrl.u32 %v323, 7
        %v325 = vsub.s32 %v322, %v324
        %v326 = vrot.slane %v319, %v325
        %v327 = vcombine.high %v326, %v326
        %v329 = vunpack.c.l.s4 1966171168
        %v330 = vunpack.c.0.s8 %v329
        %v331 = vlaneseq
        %v332 = vshrl.u32 %v331, 7
        %v333 = vsub.s32 %v330, %v332
        %v334 = vrot.slane %v326, %v333
        %v336 = vunpack.c.l.s4 1966171168
        %v337 = vunpack.c.0.s8 %v336
        %v338 = vlaneseq
        %v339 = vshrl.u32 %v338, 7
        %v340 = vsub.s32 %v337, %v339
        %v341 = vrot.slane %v327, %v340
        %v342 = vlaneseq
        %v343 = vshrl.u32 %v342, 7
        %v344 = vsub.s32 0, %v343
        %v345 = vrot.slane %v334, %v344
        %v346 = vlaneseq
        %v347 = vshrl.u32 %v346, 7
        %v348 = vsub.s32 0, %v347
        %v349 = vrot.slane %v341, %v348
        %vm350 = vcmp.ge.s32.totalorder %v315, %v345
        %vm351 = vcmp.ge.s32.totalorder %v316, %v345
        %vm352 = vcmp.ge.s32.totalorder %v315, %v349
        %vm353 = vcmp.ge.s32.totalorder %v316, %v349
        %v354 = vadd.s32 %v334, 4
        %v355 = vadd.s32 %v341, 4
        %v356 = vlaneseq
        %v357 = vshrl.u32 %v356, 7
        %v358 = vsub.s32 0, %v357
        %v359 = vrot.slane %v354, %v358
        %v360 = vlaneseq
        %v361 = vshrl.u32 %v360, 7
        %v362 = vsub.s32 0, %v361
        %v363 = vrot.slane %v355, %v362
        %vm364 = vcmp.lt.s32.totalorder %v315, %v359
        %vm365 = vcmp.lt.s32.totalorder %v316, %v359
        %vm366 = vcmp.lt.s32.totalorder %v315, %v363
        %vm367 = vcmp.lt.s32.totalorder %v316, %v363
        %vm368 = vmand %vm350, %vm364
        %vm369 = vmand %vm351, %vm365
        %vm370 = vmand %vm352, %vm366
        %vm371 = vmand %vm353, %vm367
        %v372 = vsel %vm368, 1, 0
        %v373 = vsel %vm369, 1, 0
        %v374 = vsel %vm370, 1, 0
        %v375 = vsel %vm371, 1, 0
        %376 = vrot.lane.b32.xlu0 %v372, 127
        %v377 = vpop.permute.xlu0 %376
        %378 = vrot.lane.b32.xlu0 %v373, 127
        %v379 = vpop.permute.xlu0 %378
        %380 = vrot.lane.b32.xlu0 %v374, 127
        %v381 = vpop.permute.xlu0 %380
        %382 = vrot.lane.b32.xlu0 %v375, 127
        %v383 = vpop.permute.xlu0 %382
        %vm384 = vcmp.ne.s32.totalorder %v377, 0
        %vm385 = vcmp.ne.s32.totalorder %v379, 0
        %vm386 = vcmp.ne.s32.totalorder %v381, 0
        %vm387 = vcmp.ne.s32.totalorder %v383, 0
        %vm388 = vmor %vm368, %vm384
        %vm389 = vmor %vm369, %vm385
        %vm390 = vmor %vm370, %vm386
        %vm391 = vmor %vm371, %vm387
        %v392 = vld [vmem:[%s311] sm:$0x3]
        %v394 = vunpack.c.l.s4 1966171168
        %v395 = vunpack.c.0.s8 %v394
        %v396 = vlaneseq
        %v397 = vshrl.u32 %v396, 7
        %v398 = vsub.s32 %v395, %v397
        %v399 = vrot.slane %v392, %v398
        %v400 = vcombine.high %v399, %v399
        %v402 = vunpack.c.l.s4 1966171168
        %v403 = vunpack.c.0.s8 %v402
        %v404 = vlaneseq
        %v405 = vshrl.u32 %v404, 7
        %v406 = vsub.s32 %v403, %v405
        %v407 = vrot.slane %v399, %v406
        %v409 = vunpack.c.l.s4 1966171168
        %v410 = vunpack.c.0.s8 %v409
        %v411 = vlaneseq
        %v412 = vshrl.u32 %v411, 7
        %v413 = vsub.s32 %v410, %v412
        %v414 = vrot.slane %v400, %v413
        %415 = vset.pattern.permute.xlu0 0
        %416 = vperm.xlu0 %415, %v407
        %v417 = vpop.permute.xlu0 %416
        %v418 = vlaneseq
        %v419 = vshrl.u32 %v418, 7
        %v420 = vsub.s32 0, %v419
        %v421 = vrot.slane %v417, %v420
        %422 = vset.pattern.permute.xlu0 0
        %423 = vperm.xlu0 %422, %v414
        %v424 = vpop.permute.xlu0 %423
        %v425 = vlaneseq
        %v426 = vshrl.u32 %v425, 7
        %v427 = vsub.s32 0, %v426
        %v428 = vrot.slane %v424, %v427
        %vm429 = vcmp.ge.s32.totalorder %v318, %v421
        %vm430 = vcmp.ge.s32.totalorder %v318, %v428
        %v431 = vadd.s32 %v407, 16
        %v432 = vadd.s32 %v414, 16
        %433 = vset.pattern.permute.xlu0 0
        %434 = vperm.xlu0 %433, %v431
        %v435 = vpop.permute.xlu0 %434
        %v436 = vlaneseq
        %v437 = vshrl.u32 %v436, 7
        %v438 = vsub.s32 0, %v437
        %v439 = vrot.slane %v435, %v438
        %440 = vset.pattern.permute.xlu0 0
        %441 = vperm.xlu0 %440, %v432
        %v442 = vpop.permute.xlu0 %441
        %v443 = vlaneseq
        %v444 = vshrl.u32 %v443, 7
        %v445 = vsub.s32 0, %v444
        %v446 = vrot.slane %v442, %v445
        %vm447 = vcmp.lt.s32.totalorder %v318, %v439
        %vm448 = vcmp.lt.s32.totalorder %v318, %v446
        %vm449 = vmand %vm429, %vm447
        %vm450 = vmand %vm430, %vm448
        %451 = vset.pattern.permute.xlu0 1
        %452 = vperm.xlu0 %451, %v407
        %v453 = vpop.permute.xlu0 %452
        %v454 = vlaneseq
        %v455 = vshrl.u32 %v454, 7
        %v456 = vsub.s32 0, %v455
        %v457 = vrot.slane %v453, %v456
        %458 = vset.pattern.permute.xlu0 1
        %459 = vperm.xlu0 %458, %v414
        %v460 = vpop.permute.xlu0 %459
        %v461 = vlaneseq
        %v462 = vshrl.u32 %v461, 7
        %v463 = vsub.s32 0, %v462
        %v464 = vrot.slane %v460, %v463
        %vm465 = vcmp.ge.s32.totalorder %v318, %v457
        %vm466 = vcmp.ge.s32.totalorder %v318, %v464
        %467 = vset.pattern.permute.xlu0 1
        %468 = vperm.xlu0 %467, %v431
        %v469 = vpop.permute.xlu0 %468
        %v470 = vlaneseq
        %v471 = vshrl.u32 %v470, 7
        %v472 = vsub.s32 0, %v471
        %v473 = vrot.slane %v469, %v472
        %474 = vset.pattern.permute.xlu0 1
        %475 = vperm.xlu0 %474, %v432
        %v476 = vpop.permute.xlu0 %475
        %v477 = vlaneseq
        %v478 = vshrl.u32 %v477, 7
        %v479 = vsub.s32 0, %v478
        %v480 = vrot.slane %v476, %v479
        %vm481 = vcmp.lt.s32.totalorder %v318, %v473
        %vm482 = vcmp.lt.s32.totalorder %v318, %v480
        %vm483 = vmand %vm465, %vm481
        %vm484 = vmand %vm466, %vm482
        %vm485 = vmor %vm449, %vm483
        %vm486 = vmor %vm450, %vm484
        %v487 = vsel %vm388, 1, 0
        %v488 = vsel %vm389, 1, 0
        %v489 = vsel %vm390, 1, 0
        %v490 = vsel %vm391, 1, 0
        %491 = vset.pattern.permute.xlu0 0
        %492 = vperm.xlu0 %491, %v487
        %v493 = vpop.permute.xlu0 %492
        %494 = vset.pattern.permute.xlu0 0
        %495 = vperm.xlu0 %494, %v488
        %v496 = vpop.permute.xlu0 %495
        %497 = vset.pattern.permute.xlu0 0
        %498 = vperm.xlu0 %497, %v489
        %v499 = vpop.permute.xlu0 %498
        %500 = vset.pattern.permute.xlu0 0
        %501 = vperm.xlu0 %500, %v490
        %v502 = vpop.permute.xlu0 %501
        %vm503 = vcmp.eq.s32.totalorder %v493, 1
        %vm504 = vcmp.eq.s32.totalorder %v496, 1
        %vm505 = vcmp.eq.s32.totalorder %v499, 1
        %vm506 = vcmp.eq.s32.totalorder %v502, 1
        %v507 = vsel %vm485, 1, 0
        %v508 = vsel %vm486, 1, 0
        %vm509 = vcmp.eq.s32.totalorder %v507, 1
        %vm510 = vcmp.eq.s32.totalorder %v508, 1
        %vm511 = vmor %vm503, %vm509
        %vm512 = vmor %vm504, %vm509
        %vm513 = vmor %vm505, %vm510
        %vm514 = vmor %vm506, %vm510
        %v515 = vld [vmem:[%s299] sm:$0x3]
        %v516 = vld [vmem:[%s303] sm:$0x3]
        %v518 = vunpack.c.l.s4 1966171168
        %v519 = vunpack.c.0.s8 %v518
        %v520 = vlaneseq
        %v521 = vshrl.u32 %v520, 7
        %v522 = vsub.s32 %v519, %v521
        %v523 = vrot.slane %v515, %v522
        %v524 = vcombine.high %v523, %v523
        %v526 = vunpack.c.l.s4 1966171168
        %v527 = vunpack.c.0.s8 %v526
        %v528 = vlaneseq
        %v529 = vshrl.u32 %v528, 7
        %v530 = vsub.s32 %v527, %v529
        %v531 = vrot.slane %v523, %v530
        %v533 = vunpack.c.l.s4 1966171168
        %v534 = vunpack.c.0.s8 %v533
        %v535 = vlaneseq
        %v536 = vshrl.u32 %v535, 7
        %v537 = vsub.s32 %v534, %v536
        %v538 = vrot.slane %v524, %v537
        %v540 = vunpack.c.l.s4 1966171168
        %v541 = vunpack.c.0.s8 %v540
        %v542 = vlaneseq
        %v543 = vshrl.u32 %v542, 7
        %v544 = vsub.s32 %v541, %v543
        %v545 = vrot.slane %v516, %v544
        %v546 = vcombine.high %v545, %v545
        %v548 = vunpack.c.l.s4 1966171168
        %v549 = vunpack.c.0.s8 %v548
        %v550 = vlaneseq
        %v551 = vshrl.u32 %v550, 7
        %v552 = vsub.s32 %v549, %v551
        %v553 = vrot.slane %v545, %v552
        %v555 = vunpack.c.l.s4 1966171168
        %v556 = vunpack.c.0.s8 %v555
        %v557 = vlaneseq
        %v558 = vshrl.u32 %v557, 7
        %v559 = vsub.s32 %v556, %v558
        %v560 = vrot.slane %v546, %v559
        %v561 = vlaneseq
        %v562 = vshrl.u32 %v561, 7
        %v563 = vsub.s32 0, %v562
        %v564 = vrot.slane %v531, %v563
        %v565 = vlaneseq
        %v566 = vshrl.u32 %v565, 7
        %v567 = vsub.s32 0, %v566
        %v568 = vrot.slane %v538, %v567
        %vm569 = vcmp.ge.s32.totalorder %v315, %v564
        %vm570 = vcmp.ge.s32.totalorder %v316, %v564
        %vm571 = vcmp.ge.s32.totalorder %v315, %v568
        %vm572 = vcmp.ge.s32.totalorder %v316, %v568
        %v573 = vadd.s32 %v531, 5
        %v574 = vadd.s32 %v538, 5
        %v575 = vlaneseq
        %v576 = vshrl.u32 %v575, 7
        %v577 = vsub.s32 0, %v576
        %v578 = vrot.slane %v573, %v577
        %v579 = vlaneseq
        %v580 = vshrl.u32 %v579, 7
        %v581 = vsub.s32 0, %v580
        %v582 = vrot.slane %v574, %v581
        %vm583 = vcmp.lt.s32.totalorder %v315, %v578
        %vm584 = vcmp.lt.s32.totalorder %v316, %v578
        %vm585 = vcmp.lt.s32.totalorder %v315, %v582
        %vm586 = vcmp.lt.s32.totalorder %v316, %v582
        %vm587 = vmand %vm569, %vm583
        %vm588 = vmand %vm570, %vm584
        %vm589 = vmand %vm571, %vm585
        %vm590 = vmand %vm572, %vm586
        %591 = vset.pattern.permute.xlu0 0
        %592 = vperm.xlu0 %591, %v553
        %v593 = vpop.permute.xlu0 %592
        %v594 = vlaneseq
        %v595 = vshrl.u32 %v594, 7
        %v596 = vsub.s32 0, %v595
        %v597 = vrot.slane %v593, %v596
        %598 = vset.pattern.permute.xlu0 0
        %599 = vperm.xlu0 %598, %v560
        %v600 = vpop.permute.xlu0 %599
        %v601 = vlaneseq
        %v602 = vshrl.u32 %v601, 7
        %v603 = vsub.s32 0, %v602
        %v604 = vrot.slane %v600, %v603
        %vm605 = vcmp.ge.s32.totalorder %v318, %v597
        %vm606 = vcmp.ge.s32.totalorder %v318, %v604
        %v607 = vadd.s32 %v553, 3
        %v608 = vadd.s32 %v560, 3
        %609 = vset.pattern.permute.xlu0 0
        %610 = vperm.xlu0 %609, %v607
        %v611 = vpop.permute.xlu0 %610
        %v612 = vlaneseq
        %v613 = vshrl.u32 %v612, 7
        %v614 = vsub.s32 0, %v613
        %v615 = vrot.slane %v611, %v614
        %616 = vset.pattern.permute.xlu0 0
        %617 = vperm.xlu0 %616, %v608
        %v618 = vpop.permute.xlu0 %617
        %v619 = vlaneseq
        %v620 = vshrl.u32 %v619, 7
        %v621 = vsub.s32 0, %v620
        %v622 = vrot.slane %v618, %v621
        %vm623 = vcmp.lt.s32.totalorder %v318, %v615
        %vm624 = vcmp.lt.s32.totalorder %v318, %v622
        %vm625 = vmand %vm605, %vm623
        %vm626 = vmand %vm606, %vm624
        %v627 = vsel %vm587, 1, 0
        %v628 = vsel %vm588, 1, 0
        %v629 = vsel %vm589, 1, 0
        %v630 = vsel %vm590, 1, 0
        %631 = vset.pattern.permute.xlu0 0
        %632 = vperm.xlu0 %631, %v627
        %v633 = vpop.permute.xlu0 %632
        %634 = vset.pattern.permute.xlu0 0
        %635 = vperm.xlu0 %634, %v628
        %v636 = vpop.permute.xlu0 %635
        %637 = vset.pattern.permute.xlu0 0
        %638 = vperm.xlu0 %637, %v629
        %v639 = vpop.permute.xlu0 %638
        %640 = vset.pattern.permute.xlu0 0
        %641 = vperm.xlu0 %640, %v630
        %v642 = vpop.permute.xlu0 %641
        %vm643 = vcmp.eq.s32.totalorder %v633, 1
        %vm644 = vcmp.eq.s32.totalorder %v636, 1
        %vm645 = vcmp.eq.s32.totalorder %v639, 1
        %vm646 = vcmp.eq.s32.totalorder %v642, 1
        %v647 = vsel %vm625, 1, 0
        %v648 = vsel %vm626, 1, 0
        %vm649 = vcmp.eq.s32.totalorder %v647, 1
        %vm650 = vcmp.eq.s32.totalorder %v648, 1
        %vm651 = vmand %vm643, %vm649
        %vm652 = vmand %vm644, %vm649
        %vm653 = vmand %vm645, %vm650
        %vm654 = vmand %vm646, %vm650
        %vm655 = vmor %vm511, %vm651
        %vm656 = vmor %vm512, %vm652
        %vm657 = vmor %vm513, %vm653
        %vm658 = vmor %vm514, %vm654
        %659 = vset.pattern.permute.xlu0 1
        %660 = vperm.xlu0 %659, %v553
        %v661 = vpop.permute.xlu0 %660
        %v662 = vlaneseq
        %v663 = vshrl.u32 %v662, 7
        %v664 = vsub.s32 0, %v663
        %v665 = vrot.slane %v661, %v664
        %666 = vset.pattern.permute.xlu0 1
        %667 = vperm.xlu0 %666, %v560
        %v668 = vpop.permute.xlu0 %667
        %v669 = vlaneseq
        %v670 = vshrl.u32 %v669, 7
        %v671 = vsub.s32 0, %v670
        %v672 = vrot.slane %v668, %v671
        %vm673 = vcmp.ge.s32.totalorder %v318, %v665
        %vm674 = vcmp.ge.s32.totalorder %v318, %v672
        %675 = vset.pattern.permute.xlu0 1
        %676 = vperm.xlu0 %675, %v607
        %v677 = vpop.permute.xlu0 %676
        %v678 = vlaneseq
        %v679 = vshrl.u32 %v678, 7
        %v680 = vsub.s32 0, %v679
        %v681 = vrot.slane %v677, %v680
        %682 = vset.pattern.permute.xlu0 1
        %683 = vperm.xlu0 %682, %v608
        %v684 = vpop.permute.xlu0 %683
        %v685 = vlaneseq
        %v686 = vshrl.u32 %v685, 7
        %v687 = vsub.s32 0, %v686
        %v688 = vrot.slane %v684, %v687
        %vm689 = vcmp.lt.s32.totalorder %v318, %v681
        %vm690 = vcmp.lt.s32.totalorder %v318, %v688
        %vm691 = vmand %vm673, %vm689
        %vm692 = vmand %vm674, %vm690
        %693 = vset.pattern.permute.xlu0 1
        %694 = vperm.xlu0 %693, %v627
        %v695 = vpop.permute.xlu0 %694
        %696 = vset.pattern.permute.xlu0 1
        %697 = vperm.xlu0 %696, %v628
        %v698 = vpop.permute.xlu0 %697
        %699 = vset.pattern.permute.xlu0 1
        %700 = vperm.xlu0 %699, %v629
        %v701 = vpop.permute.xlu0 %700
        %702 = vset.pattern.permute.xlu0 1
        %703 = vperm.xlu0 %702, %v630
        %v704 = vpop.permute.xlu0 %703
        %vm705 = vcmp.eq.s32.totalorder %v695, 1
        %vm706 = vcmp.eq.s32.totalorder %v698, 1
        %vm707 = vcmp.eq.s32.totalorder %v701, 1
        %vm708 = vcmp.eq.s32.totalorder %v704, 1
        %v709 = vsel %vm691, 1, 0
        %v710 = vsel %vm692, 1, 0
        %vm711 = vcmp.eq.s32.totalorder %v709, 1
        %vm712 = vcmp.eq.s32.totalorder %v710, 1
        %vm713 = vmand %vm705, %vm711
        %vm714 = vmand %vm706, %vm711
        %vm715 = vmand %vm707, %vm712
        %vm716 = vmand %vm708, %vm712
        %vm717 = vmor %vm655, %vm713
        %vm718 = vmor %vm656, %vm714
        %vm719 = vmor %vm657, %vm715
        %vm720 = vmor %vm658, %vm716
        %v721 = vld [vmem:[%s253] sm:$0xff]
        %v722 = vld [vmem:[%s253 + $0x8] sm:$0xff]
        %v723 = vld [vmem:[%s253 + $0x10] sm:$0xff]
        %v724 = vld [vmem:[%s253 + $0x18] sm:$0xff]
        %v725 = vsel %vm717, 0.0, %v721
        %v726 = vsel %vm718, 0.0, %v722
        %v727 = vsel %vm719, 0.0, %v723
        %v728 = vsel %vm720, 0.0, %v724
        %729 = vst [vmem:[%s295] sm:$0xff] %v725
        %730 = vst [vmem:[%s295 + $0x8] sm:$0xff] %v726
        %731 = vst [vmem:[%s295 + $0x10] sm:$0xff] %v727
        %732 = vst [vmem:[%s295 + $0x18] sm:$0xff] %v728
        %s733 = sand.u32 %s160, 1
        %s734 = scalar_lea.sflag [#allocation4], %s733
        %s735 = sand.u32 %s160, 1
        %s736 = smul.addr %s735, 32
        %s737 = scalar_lea.vmem [#allocation5], %s736
        // Predicated region
        $region45: #{tpu_custom_call.1} parent=39 // pred_check
          %p738 = pneg %p170
        $region46: #{tpu_custom_call.1} parent=39 // pred_check_branch
          %740 = sbr.rel (%p738) target = $region48
        $region47: #{tpu_custom_call.1} parent=39 // pred_region
          %s741 = smul.u32 2, %s22
          %s743 = ssub.s32 512, 512
          %744 = vsyncadd %s734, %s743
          %s745 = smul.addr %s741, 2
          %s746 = smul.addr %s745, 128
          %s747 = scalar_lea.hbm %s5, %s746
          %s748 = sshll.u32 %s737, 4
          %s749 = int_to_ptr.vmem [resolvable:$true] %s748
          %754 = dma.vmem_to_hbm [thread:$0]  %s749, 512, %s747, %s734, 128, 128, 8
        $region48: #{tpu_custom_call.1} parent=39 // pred_fallthru
          _
      $region40: #{tpu_custom_call.1} parent=5 // pred_fallthru
        _
      %p755 = scmp.le.s32.totalorder 2, %s17
      // Predicated region
      $region49: #{tpu_custom_call.1} parent=5 // pred_check
        %p756 = pneg %p755
      $region50: #{tpu_custom_call.1} parent=5 // pred_check_branch
        %758 = sbr.rel (%p756) target = $region52
      $region51: #{tpu_custom_call.1} parent=5 // pred_region
        %s759 = ssub.s32 %s17, 2
        // Predicated region
        $region53: #{tpu_custom_call.1} parent=51 // pred_check
          %p760 = pneg %p176
        $region54: #{tpu_custom_call.1} parent=51 // pred_check_branch
          %762 = sbr.rel (%p760) target = $region56
        $region55: #{tpu_custom_call.1} parent=51 // pred_region
          %s763 = sand.u32 %s161, 1
          %s764 = scalar_lea.sflag [#allocation4], %s763
          %s765 = sand.u32 %s161, 1
          %s766 = smul.addr %s765, 32
          %s767 = scalar_lea.vmem [#allocation5], %s766
          %768 = dma.done %s764, 512
        $region56: #{tpu_custom_call.1} parent=51 // pred_fallthru
          _
      $region52: #{tpu_custom_call.1} parent=5 // pred_fallthru
        _
    $region6: #{tpu_custom_call.1} parent=1 // loop_footer
      %s21 = sadd.s32 1, %s17
    $region7: #{tpu_custom_call.1} parent=1 // loop_footer_branch
      %16 = sbr.rel target = $region3
    $region8: #{tpu_custom_call.1} parent=1 // loop_exit
      _
    %769 = vsyncpa [#allocation3], 1
    %s770 = scalar_lea.sflag [#allocation3], 1
    %771 = vsyncpa %s770, 1
    %772 = vsyncpa [#allocation4], 1
    %s773 = scalar_lea.sflag [#allocation4], 1
    %774 = vsyncpa %s773, 1

</llo_original>
